<compile_context>
chip_gen: v5e
topology: v5e:2x2
jax: 0.10.0
libtpu: 0.0.40
codegen_flags: <defaults>
</compile_context>

<pallas_src>
import math

import jax
import jax.numpy as jnp
from jax.experimental import pallas as pl
from jax.experimental.pallas import tpu as pltpu


def _round_up(x, m):
    return (x + m - 1) // m * m


# ---------------- kernels ----------------

def _fused_kernel(x_ref, w_ref, o_ref):
    # Single dense matmul: [tm, in_p] @ [in_p, out_p] -> [tm, out_p], f32 accumulate.
    o_ref[...] = jnp.dot(
        x_ref[...], w_ref[...], preferred_element_type=jnp.float32
    ).astype(o_ref.dtype)


def _lowrank_kernel(x_ref, u_ref, v_ref, o_ref):
    # Faithful two-step low-rank form: ([tm, in_p] @ [in_p, r]) @ [r, out_p].
    h = jnp.dot(x_ref[...], u_ref[...], preferred_element_type=jnp.float32)
    o_ref[...] = jnp.dot(
        h, v_ref[...], preferred_element_type=jnp.float32
    ).astype(o_ref.dtype)


# ---------------- wrapper ----------------

def lowrank_linear(x, u_t, v_t, *, tm=256, fuse_factors=None):
    """x: [..., in]; u_t: [in, rank] (= U.weight.T); v_t: [rank, out] (= V.weight.T)."""
    orig_shape = x.shape
    in_f = orig_shape[-1]
    x2 = x.reshape(-1, in_f)
    m = x2.shape[0]
    rank = u_t.shape[1]
    out_f = v_t.shape[1]
    assert u_t.shape[0] == in_f and v_t.shape[0] == rank

    # Heuristic: fuse the rank-`rank` factors into one dense weight when the fused
    # f32 weight is small (<= ~4 MiB); at rank=8 the fused matmul halves MXU pushes.
    if fuse_factors is None:
        fuse_factors = (in_f * out_f) <= (1 << 20)

    # Lane-align feature dims to 128 (lane-dense loads/stores).
    in_p = _round_up(in_f, 128)
    out_p = _round_up(out_f, 128)

    # Row tile: as large as reasonable, multiple of 8, no bigger than (padded) M.
    tm = max(8, min(tm, _round_up(m, 8)))
    tm = _round_up(tm, 8)
    m_p = _round_up(m, tm)

    if m_p != m or in_p != in_f:
        x2 = jnp.pad(x2, ((0, m_p - m), (0, in_p - in_f)))

    grid = (m_p // tm,)
    cparams = pltpu.CompilerParams(dimension_semantics=("parallel",))

    if fuse_factors:
        # Pre-fuse in the wrapper (weight-only preprocessing, independent of M).
        w = jnp.dot(u_t, v_t, preferred_element_type=jnp.float32).astype(x.dtype)
        w = jnp.pad(w, ((0, in_p - in_f), (0, out_p - out_f)))
        out = pl.pallas_call(
            _fused_kernel,
            out_shape=jax.ShapeDtypeStruct((m_p, out_p), x.dtype),
            grid_spec=pltpu.PrefetchScalarGridSpec(
                num_scalar_prefetch=0,
                grid=grid,
                in_specs=[
                    pl.BlockSpec((tm, in_p), lambda i: (i, 0)),
                    pl.BlockSpec((in_p, out_p), lambda i: (0, 0)),
                ],
                out_specs=pl.BlockSpec((tm, out_p), lambda i: (i, 0)),
            ),
            compiler_params=cparams,
        )(x2, w)
    else:
        u_p = jnp.pad(u_t, ((0, in_p - in_f), (0, 0)))
        v_p = jnp.pad(v_t, ((0, 0), (0, out_p - out_f)))
        out = pl.pallas_call(
            _lowrank_kernel,
            out_shape=jax.ShapeDtypeStruct((m_p, out_p), x.dtype),
            grid_spec=pltpu.PrefetchScalarGridSpec(
                num_scalar_prefetch=0,
                grid=grid,
                in_specs=[
                    pl.BlockSpec((tm, in_p), lambda i: (i, 0)),
                    pl.BlockSpec((in_p, rank), lambda i: (0, 0)),
                    pl.BlockSpec((rank, out_p), lambda i: (0, 0)),
                ],
                out_specs=pl.BlockSpec((tm, out_p), lambda i: (i, 0)),
            ),
            compiler_params=cparams,
        )(x2, u_p, v_p)

    out = out[:m, :out_f]
    return out.reshape(*orig_shape[:-1], out_f)


def reference_lowrank_linear(x, u_t, v_t):
    in_f = x.shape[-1]
    out_f = v_t.shape[1]
    return (x.reshape(-1, in_f) @ u_t @ v_t).reshape(*x.shape[:-1], out_f)


if __name__ == "__main__":
    # Small shapes consistent with the module: tokens [batch=2, seq=8] over
    # in_features=32 -> rank=8 -> out_features=48.
    in_features, out_features, rank = 32, 48, 8
    batch, seq = 2, 8

    key = jax.random.PRNGKey(0)
    kx, ku, kv = jax.random.split(key, 3)

    x = jax.random.normal(kx, (batch, seq, in_features), dtype=jnp.float32)
    # nn.Linear weights are [out, in]; we materialize their transposes directly.
    u_t = jax.random.normal(ku, (in_features, rank), jnp.float32) * (1.0 / math.sqrt(in_features))
    v_t = jax.random.normal(kv, (rank, out_features), jnp.float32) * (1.0 / math.sqrt(rank))

    ref = reference_lowrank_linear(x, u_t, v_t)

    # Default path: factors pre-fused in the wrapper, single dense MXU matmul.
    out_fused = jax.block_until_ready(lowrank_linear(x, u_t, v_t))
    # Faithful low-rank path (two matmuls in-kernel), also validated.
    out_lowrank = jax.block_until_ready(lowrank_linear(x, u_t, v_t, fuse_factors=False))

    assert out_fused.shape == (batch, seq, out_features)
    assert out_lowrank.shape == (batch, seq, out_features)
    assert jnp.allclose(out_fused, ref, atol=1e-4, rtol=1e-4), "fused path mismatch vs reference"
    assert jnp.allclose(out_lowrank, ref, atol=1e-4, rtol=1e-4), "low-rank path mismatch vs reference"

    print("KERNEL_OK")
</pallas_src>

<mosaic_0001>
module attributes {stable_mosaic.version = 11 : i64} {
  func.func @_fused_kernel(%arg0: i32, %arg1: memref<16x128xf32, #tpu.memory_space<vmem>>, %arg2: memref<128x128xf32, #tpu.memory_space<vmem>>, %arg3: memref<16x128xf32, #tpu.memory_space<vmem>>) attributes {dimension_semantics = [#tpu.dimension_semantics<parallel>], iteration_bounds = array<i64: 1>, scalar_prefetch = 0 : i64, scratch_operands = 0 : i64, tpu.core_type = #tpu.core_type<tc>, window_params = [{transform_indices = @transform_0, window_bounds = array<i64: 16, 128>}, {pipeline_mode = #tpu.pipeline_mode<synchronous>, transform_indices = @transform_1, window_bounds = array<i64: 128, 128>}, {transform_indices = @transform_2, window_bounds = array<i64: 16, 128>}]} {
    %c0 = arith.constant 0 : index
    %c0_0 = arith.constant 0 : index
    %0 = vector.load %arg1[%c0, %c0_0] : memref<16x128xf32, #tpu.memory_space<vmem>>, vector<16x128xf32>
    %c0_1 = arith.constant 0 : index
    %c0_2 = arith.constant 0 : index
    %1 = vector.load %arg2[%c0_1, %c0_2] : memref<128x128xf32, #tpu.memory_space<vmem>>, vector<128x128xf32>
    %cst = arith.constant dense<0.000000e+00> : vector<16x128xf32>
    %2 = tpu.matmul %0, %1, %cst {dimension_numbers = #tpu.dot_dimension_numbers<[1], [0], [0], [1], [0, 0, 1, 1], [], []>} : vector<16x128xf32>, vector<128x128xf32>, vector<16x128xf32> -> vector<16x128xf32>
    %c0_3 = arith.constant 0 : index
    %c0_4 = arith.constant 0 : index
    %3 = vector.load %arg3[%c0_3, %c0_4] : memref<16x128xf32, #tpu.memory_space<vmem>>, vector<16x128xf32>
    tpu.vector_store %arg3[%c0_3, %c0_4], %2 {strides = array<i32>} : memref<16x128xf32, #tpu.memory_space<vmem>>, vector<16x128xf32>,
    return
  }
  func.func @transform_0(%arg0: i32) -> (i32, i32) {
    %c0_i32 = arith.constant 0 : i32
    %c0_i32_0 = arith.constant 0 : i32
    return %arg0, %c0_i32 : i32, i32
  }
  func.func @transform_1(%arg0: i32) -> (i32, i32) {
    %c0_i32 = arith.constant 0 : i32
    %c0_i32_0 = arith.constant 0 : i32
    %c0_i32_1 = arith.constant 0 : i32
    return %c0_i32, %c0_i32_0 : i32, i32
  }
  func.func @transform_2(%arg0: i32) -> (i32, i32) {
    %c0_i32 = arith.constant 0 : i32
    %c0_i32_0 = arith.constant 0 : i32
    return %arg0, %c0_i32 : i32, i32
  }
}

</mosaic_0001>

<llo_original>
// kernel: tpu_custom_call.1
$region0: #{tpu_custom_call.1}
  #allocation0 [shape = 'u32[]', space=smem, size = 0x4, offset = 0x4, fixed_abs, tag = 'smem constant byte address 0x4 - core index']
  #allocation1 [shape = 'u32[72,128]{1,0:T(1,128)}', space=vmem, size = 0x9000, scoped, tag = 'internal scratch']
  %s0 = inlined_call_operand.hbm [shape: f32[16,128], index: 0, kind: input, shape index: {}]
  %s1 = inlined_call_operand.hbm [shape: f32[128,128], index: 1, kind: input, shape index: {}]
  %s2 = inlined_call_operand.hbm [shape: f32[16,128], index: 2, kind: output, shape index: {}]
  %s3 = sld [smem:[#allocation0]]
  $region26: #{tpu_custom_call.1} parent=0
    _
  %s5 = ssub.s32 1, %s3
  %s6 = scalar_select 0, %s5, %s3
  $region1: #{tpu_custom_call.1} parent=0
    #allocation2 [shape = 'u8[8192]{0}', space=vmem, size = 0x2000, scoped, tag = 'input window, operand 0, single buffered']
    #allocation3 [shape = 's32[1]{0}', space=sflag, size = 0x4, scoped, tag = 'scoped memory for tpu_custom_call.1']
    #allocation4 [shape = 's32[1]{0}', space=sflag, size = 0x4, scoped, tag = 'scoped memory for tpu_custom_call.1']
    #allocation5 [shape = 'u8[65536]{0}', space=vmem, size = 0x10000, scoped, tag = 'input window, operand 1, single buffered']
    #allocation6 [shape = 's32[1]{0}', space=sflag, size = 0x4, scoped, tag = 'scoped memory for tpu_custom_call.1']
    #allocation7 [shape = 'u8[8192]{0}', space=vmem, size = 0x2000, scoped, tag = 'output window, operand 0, single buffered']
    %7 = vsyncpa [#allocation3], 0
    %8 = vsyncpa [#allocation6], 0
    %9 = vsyncpa [#allocation4], 0
    // Predicated region
    $region2: #{tpu_custom_call.1} parent=1 // pred_check
      _
    $region3: #{tpu_custom_call.1} parent=1 // pred_check_branch
      %11 = sbr.rel (0) target = $region5
    $region4: #{tpu_custom_call.1} parent=1 // pred_region
      %13 = vsyncadd [#allocation3], 0
      %s14 = sshll.u32 %s0, 4
      %s15 = int_to_ptr.hbm [resolvable:$true] %s14
      %s16 = sshll.u32 [#allocation2], 4
      %s17 = int_to_ptr.vmem [resolvable:$true] %s16
      %22 = dma.hbm_to_vmem [thread:$0]  %s15, 256, %s17, [#allocation3], 128, 128, 8
    $region5: #{tpu_custom_call.1} parent=1 // pred_fallthru
      _
    // Predicated region
    $region6: #{tpu_custom_call.1} parent=1 // pred_check
      _
    $region7: #{tpu_custom_call.1} parent=1 // pred_check_branch
      %24 = sbr.rel (0) target = $region9
    $region8: #{tpu_custom_call.1} parent=1 // pred_region
      %26 = vsyncadd [#allocation6], 0
      %s27 = sshll.u32 %s1, 4
      %s28 = int_to_ptr.hbm [resolvable:$true] %s27
      %s29 = sshll.u32 [#allocation5], 4
      %s30 = int_to_ptr.vmem [resolvable:$true] %s29
      %35 = dma.hbm_to_vmem [thread:$0]  %s28, 2048, %s30, [#allocation6], 128, 128, 8
    $region9: #{tpu_custom_call.1} parent=1 // pred_fallthru
      _
    // Predicated region
    $region10: #{tpu_custom_call.1} parent=1 // pred_check
      _
    $region11: #{tpu_custom_call.1} parent=1 // pred_check_branch
      %37 = sbr.rel (0) target = $region13
    $region12: #{tpu_custom_call.1} parent=1 // pred_region
      %39 = dma.done [#allocation3], 256
    $region13: #{tpu_custom_call.1} parent=1 // pred_fallthru
      _
    // Predicated region
    $region14: #{tpu_custom_call.1} parent=1 // pred_check
      _
    $region15: #{tpu_custom_call.1} parent=1 // pred_check_branch
      %41 = sbr.rel (0) target = $region17
    $region16: #{tpu_custom_call.1} parent=1 // pred_region
      %43 = dma.done [#allocation6], 2048
    $region17: #{tpu_custom_call.1} parent=1 // pred_fallthru
      _
    %v44 = vld [vmem:[#allocation2] sm:$0xff]
    %v45 = vld [vmem:[#allocation2 + $0x8] sm:$0xff]
    %v46 = vld [vmem:[#allocation5] sm:$0xff]
    %v47 = vld [vmem:[#allocation5 + $0x8] sm:$0xff]
    %v48 = vld [vmem:[#allocation5 + $0x10] sm:$0xff]
    %v49 = vld [vmem:[#allocation5 + $0x18] sm:$0xff]
    %v50 = vld [vmem:[#allocation5 + $0x20] sm:$0xff]
    %v51 = vld [vmem:[#allocation5 + $0x28] sm:$0xff]
    %v52 = vld [vmem:[#allocation5 + $0x30] sm:$0xff]
    %v53 = vld [vmem:[#allocation5 + $0x38] sm:$0xff]
    %v54 = vld [vmem:[#allocation5 + $0x40] sm:$0xff]
    %v55 = vld [vmem:[#allocation5 + $0x48] sm:$0xff]
    %v56 = vld [vmem:[#allocation5 + $0x50] sm:$0xff]
    %v57 = vld [vmem:[#allocation5 + $0x58] sm:$0xff]
    %v58 = vld [vmem:[#allocation5 + $0x60] sm:$0xff]
    %v59 = vld [vmem:[#allocation5 + $0x68] sm:$0xff]
    %v60 = vld [vmem:[#allocation5 + $0x70] sm:$0xff]
    %v61 = vld [vmem:[#allocation5 + $0x78] sm:$0xff]
    %62 = vmatpush.msra.mxu0 %v61
    %63 = vmatpush.msra.mxu0 %v60
    %64 = vmatpush.msra.mxu0 %v59
    %65 = vmatpush.msra.mxu0 %v58
    %66 = vmatpush.msra.mxu0 %v57
    %67 = vmatpush.msra.mxu0 %v56
    %68 = vmatpush.msra.mxu0 %v55
    %69 = vmatpush.msra.mxu0 %v54
    %70 = vmatpush.msra.mxu0 %v53
    %71 = vmatpush.msra.mxu0 %v52
    %72 = vmatpush.msra.mxu0 %v51
    %73 = vmatpush.msra.mxu0 %v50
    %74 = vmatpush.msra.mxu0 %v49
    %75 = vmatpush.msra.mxu0 %v48
    %76 = vmatpush.msra.mxu0 %v47
    %77 = vmatpush.msra.mxu0 %v46
    %78 = vmatmul.f32.gmra.mxu0 %v44
    %v79 = vpop.f32.mrf.mxu0
    %v80 = vadd.f32 0.0, %v79
    %81 = vmatmul.f32.gmra.mxu0 %v45
    %v82 = vpop.f32.mrf.mxu0
    %v83 = vadd.f32 0.0, %v82
    %84 = vdwg.mxu0
    %85 = vst [vmem:[#allocation7] sm:$0xff] %v80
    %86 = vst [vmem:[#allocation7 + $0x8] sm:$0xff] %v83
    // Predicated region
    $region18: #{tpu_custom_call.1} parent=1 // pred_check
      _
    $region19: #{tpu_custom_call.1} parent=1 // pred_check_branch
      %88 = sbr.rel (0) target = $region21
    $region20: #{tpu_custom_call.1} parent=1 // pred_region
      %90 = vsyncadd [#allocation4], 0
      %s91 = sshll.u32 [#allocation7], 4
      %s92 = int_to_ptr.vmem [resolvable:$true] %s91
      %s93 = sshll.u32 %s2, 4
      %s94 = int_to_ptr.hbm [resolvable:$true] %s93
      %99 = dma.vmem_to_hbm [thread:$0]  %s92, 256, %s94, [#allocation4], 128, 128, 8
    $region21: #{tpu_custom_call.1} parent=1 // pred_fallthru
      _
    // Predicated region
    $region22: #{tpu_custom_call.1} parent=1 // pred_check
      _
    $region23: #{tpu_custom_call.1} parent=1 // pred_check_branch
      %101 = sbr.rel (0) target = $region25
    $region24: #{tpu_custom_call.1} parent=1 // pred_region
      %103 = dma.done [#allocation4], 256
    $region25: #{tpu_custom_call.1} parent=1 // pred_fallthru
      _
    %104 = vsyncpa [#allocation3], 1
    %105 = vsyncpa [#allocation6], 1
    %106 = vsyncpa [#allocation4], 1

</llo_original>
